<compile_context>
chip_gen: v6e
topology: v6e:2x2x1
jax: 0.10.0
libtpu: 0.0.40
codegen_flags: <defaults>
</compile_context>

<pallas_src>
import functools

import jax
import jax.numpy as jnp
from jax import lax
from jax.experimental import pallas as pl
from jax.experimental.pallas import tpu as pltpu

_SMALL_C_MAX = 32     # threshold for the transposed (class-on-sublanes) fast path
_MAX_TM = 1024        # row-tile cap (sublanes), rows-by-classes path
_MAX_TN = 16384       # row-tile cap (lanes), transposed small-C path


def _round_up(a, b):
    return ((a + b - 1) // b) * b


def _round_down(a, b):
    return (a // b) * b


def _tpu_vmem_info():
    """(physical VMEM bytes, per-kernel scoped budget bytes)."""
    cap = 64 << 20  # conservative fallback = smallest generation (v7x, per TC)
    try:
        info = pltpu.get_tpu_info()
        cap = int(getattr(info, "vmem_capacity_bytes", cap))
    except Exception:
        pass
    budget = int(min(max(cap // 3, 12 << 20), 40 << 20))
    return cap, budget


def _num_parallel_cores():
    """2 for megacore / 2-TC chips; 1 for single-TC chips (v5e / v6e)."""
    try:
        kind = jax.devices()[0].device_kind.lower()
    except Exception:
        return 2
    if not kind.startswith("tpu"):
        return 1
    if "lite" in kind or "v5e" in kind or "v6e" in kind:
        return 1
    return 2


def _apply_focal_term(ce, log_pt, gamma):
    """loss = (1 - pt)^gamma * ce, with pt = exp(log_pt), log_pt <= 0."""
    g = float(gamma)
    if g == 0.0:
        return ce
    one_minus_pt = jnp.maximum(1.0 - jnp.exp(log_pt), 0.0)
    if g.is_integer() and 1.0 <= g <= 8.0:
        # common case (e.g. gamma=2): repeated multiplies, no pow
        focal = one_minus_pt
        for _ in range(int(g) - 1):
            focal = focal * one_minus_pt
    else:
        focal = jnp.power(one_minus_pt, jnp.float32(g))
    return focal * ce


# --------------------------------------------------------------------------- #
# Kernel A: general path — rows on sublanes, full class extent on lanes.
# --------------------------------------------------------------------------- #
def _focal_rows_kernel(x_ref, y_ref, alpha_y_ref, sum_ref, cnt_ref,
                       loss_acc, cnt_acc, *, gamma, ignore_index):
    i = pl.program_id(1)

    @pl.when(i == 0)
    def _():
        loss_acc[...] = jnp.zeros_like(loss_acc)
        cnt_acc[...] = jnp.zeros_like(cnt_acc)

    x = x_ref[...].astype(jnp.float32)            # (TM, C) raw logits, f32 math
    y = y_ref[...]                                # (TM, 1) int32 labels
    alpha_y = alpha_y_ref[...]                    # (TM, 1) f32 = alpha[y], pre-gathered
    c = x.shape[1]

    # numerically stable log-sum-exp over the exact class extent (no lane padding)
    m = jnp.max(x, axis=-1, keepdims=True)                             # (TM, 1)
    xm = x - m
    lse = jnp.log(jnp.sum(jnp.exp(xm), axis=-1, keepdims=True)) + m    # (TM, 1)

    valid = y != ignore_index                                          # (TM, 1)
    y_safe = jnp.where(valid, y, 0)
    col = lax.broadcasted_iota(jnp.int32, (1, c), 1)                   # (1, C), no (TM,C) iota
    onehot = col == y_safe                                             # (TM, C)
    x_y = jnp.sum(jnp.where(onehot, x, 0.0), axis=-1, keepdims=True)   # (TM, 1)
    # clamp: fp rounding can push log_pt a ulp above 0 -> keeps (1 - pt) >= 0
    log_pt = jnp.minimum(x_y - lse, 0.0)

    ce = -alpha_y * log_pt
    loss = _apply_focal_term(ce, log_pt, gamma)

    loss_acc[...] += jnp.where(valid, loss, 0.0)
    cnt_acc[...] += valid.astype(jnp.float32)

    @pl.when(i == pl.num_programs(1) - 1)
    def _():
        # single cross-sublane reduction per core; broadcast the scalar across the
        # lane-dense (1, 128) per-core output block.
        sum_ref[...] = jnp.zeros_like(sum_ref) + jnp.sum(loss_acc[...])
        cnt_ref[...] = jnp.zeros_like(cnt_ref) + jnp.sum(cnt_acc[...])


# --------------------------------------------------------------------------- #
# Kernel B: small-C fast path — classes on sublanes, rows on lanes (lane-dense).
# --------------------------------------------------------------------------- #
def _focal_cols_kernel(x_ref, y_ref, alpha_ref, sum_ref, cnt_ref,
                       loss_acc, cnt_acc, *, gamma, ignore_index):
    i = pl.program_id(1)

    @pl.when(i == 0)
    def _():
        loss_acc[...] = jnp.zeros_like(loss_acc)
        cnt_acc[...] = jnp.zeros_like(cnt_acc)

    x = x_ref[...].astype(jnp.float32)            # (C, TN): classes on sublanes
    y = y_ref[...]                                # (1, TN) int32 labels, lane-dense
    alpha_col = alpha_ref[...]                    # (C, 1)  per-class weights
    c = x.shape[0]

    # softmax over the sublane (class) axis — tiny XLU reductions, lanes stay dense
    m = jnp.max(x, axis=0, keepdims=True)                              # (1, TN)
    xm = x - m
    lse = jnp.log(jnp.sum(jnp.exp(xm), axis=0, keepdims=True)) + m     # (1, TN)

    valid = y != ignore_index                                          # (1, TN)
    y_safe = jnp.where(valid, y, 0)
    row = lax.broadcasted_iota(jnp.int32, (c, 1), 0)                   # (C, 1)
    onehot = row == y_safe                                             # (C, TN)
    x_y = jnp.sum(jnp.where(onehot, x, 0.0), axis=0, keepdims=True)    # (1, TN)
    alpha_y = jnp.sum(jnp.where(onehot, alpha_col, 0.0), axis=0, keepdims=True)
    log_pt = jnp.minimum(x_y - lse, 0.0)                               # (1, TN)

    ce = -alpha_y * log_pt
    loss = _apply_focal_term(ce, log_pt, gamma)

    loss_acc[...] += jnp.where(valid, loss, 0.0)                       # lane-dense VPU add
    cnt_acc[...] += valid.astype(jnp.float32)

    @pl.when(i == pl.num_programs(1) - 1)
    def _():
        sum_ref[...] = jnp.zeros_like(sum_ref) + jnp.sum(loss_acc[...])
        cnt_ref[...] = jnp.zeros_like(cnt_ref) + jnp.sum(cnt_acc[...])


# --------------------------------------------------------------------------- #
# Wrapper
# --------------------------------------------------------------------------- #
def focal_loss(x, y, alpha=None, gamma=0.0, reduction="mean",
               ignore_index=-100, hbm_dtype=None):
    """Pallas-backed FocalLoss.forward.

    x: (B, C) or (B, C, d1..dK); y: (B,) or (B, d1..dK).
    hbm_dtype: optional narrower HBM dtype for the logits (e.g. jnp.bfloat16) to
      halve DMA bytes on bandwidth-bound chips (v5e/v6e). In-kernel math stays f32;
      ~1e-3-level impact on the loss value, so it is OFF by default.
    """
    if reduction not in ("mean", "sum", "none"):
        raise ValueError('Reduction must be one of: "mean", "sum", "none".')
    if reduction == "none":
        # TODO(synk): reduction='none' returns a dynamically-sized per-valid-row
        # vector (ignored rows filtered out) — no clean static-shape Pallas
        # equivalent, so it is not kernelized.
        raise NotImplementedError("reduction='none' not kernelized")
    if x.ndim < 2:
        raise ValueError("x must be (batch, C) or (batch, C, d1..dK)")

    c = x.shape[1]
    n = x.size // c
    if n == 0:
        return jnp.float32(0.0)

    if not jnp.issubdtype(x.dtype, jnp.floating):
        x = x.astype(jnp.float32)
    if hbm_dtype is not None:
        x = x.astype(hbm_dtype)
    itemsize = jnp.dtype(x.dtype).itemsize

    if alpha is None:
        alpha_vec = jnp.ones((c,), jnp.float32)
    else:
        alpha_vec = jnp.asarray(alpha, jnp.float32).reshape(c)

    y_flat = y.reshape(-1).astype(jnp.int32)

    cores = _num_parallel_cores()
    cap, budget = _tpu_vmem_info()
    static_args = dict(gamma=float(gamma), ignore_index=int(ignore_index))

    if c <= _SMALL_C_MAX:
        # ----------------- small-C transposed fast path --------------------- #
        if x.ndim == 2:
            x_cn = x.T                                                  # (C, N)
        else:
            b = x.shape[0]
            x_cn = jnp.transpose(x.reshape(b, c, -1), (1, 0, 2)).reshape(c, -1)

        c_pad8 = _round_up(c, 8)
        # per-lane VMEM bytes: double-buffered x + f32 temporaries + y/scratch pads
        per_col = 2 * c_pad8 * itemsize + 6 * c_pad8 * 4 + 128
        tn_budget = _round_down(max(int(0.75 * budget) // per_col, 128), 128)
        tn_need = _round_up(-(-n // cores), 128)
        tn = max(128, min(_MAX_TN, tn_budget, tn_need))
        steps = -(-n // (cores * tn))
        n_pad = cores * tn * steps

        if n_pad != n:
            pad = n_pad - n
            x_cn = jnp.concatenate([x_cn, jnp.zeros((c, pad), x_cn.dtype)], axis=1)
            y_flat = jnp.concatenate(
                [y_flat, jnp.full((pad,), ignore_index, jnp.int32)])
        y_row = y_flat.reshape(1, n_pad)
        alpha_col = alpha_vec.reshape(c, 1)

        est = tn * per_col + (2 << 20)
        vmem_limit = int(min(max(budget, int(est * 1.25)), int(cap * 0.9)))

        cost = pl.CostEstimate(
            flops=int(12 * n_pad * c),
            transcendentals=int(n_pad * (c + 2)),
            bytes_accessed=int(n_pad * c * itemsize + n_pad * 4 + c * 4
                               + 2 * cores * 128 * 4))

        kernel = functools.partial(_focal_cols_kernel, **static_args)
        loss_sum, cnt = pl.pallas_call(
            kernel,
            out_shape=(jax.ShapeDtypeStruct((1, cores * 128), jnp.float32),
                       jax.ShapeDtypeStruct((1, cores * 128), jnp.float32)),
            grid_spec=pltpu.PrefetchScalarGridSpec(
                num_scalar_prefetch=0,
                grid=(cores, steps),
                in_specs=[
                    pl.BlockSpec((c, tn), lambda core, i: (0, core * steps + i)),
                    pl.BlockSpec((1, tn), lambda core, i: (0, core * steps + i)),
                    pl.BlockSpec((c, 1), lambda core, i: (0, 0)),
                ],
                out_specs=(
                    pl.BlockSpec((1, 128), lambda core, i: (0, core)),
                    pl.BlockSpec((1, 128), lambda core, i: (0, core)),
                ),
                scratch_shapes=[
                    pltpu.VMEM((1, tn), jnp.float32),   # loss accumulator (lane-dense)
                    pltpu.VMEM((1, tn), jnp.float32),   # valid-count accumulator
                ],
            ),
            compiler_params=pltpu.CompilerParams(
                dimension_semantics=("parallel", "arbitrary"),
                vmem_limit_bytes=vmem_limit),
            cost_estimate=cost,
        )(x_cn, y_row, alpha_col)
    else:
        # ----------------------- general path ------------------------------- #
        if x.ndim == 2:
            x_nc = x
        else:
            perm = (0,) + tuple(range(2, x.ndim)) + (1,)
            x_nc = jnp.transpose(x, perm).reshape(-1, c)

        # per-row VMEM bytes: double-buffered x + f32 temporaries + lane-padded
        # (tm,1) blocks (y, alpha_y, two scratch accumulators)
        per_row = 2 * c * itemsize + 6 * c * 4 + 6 * 128 * 4
        tm_budget = _round_down(max(int(0.75 * budget) // per_row, 8), 8)
        tm_need = _round_up(-(-n // cores), 8)
        tm = max(8, min(_MAX_TM, tm_budget, tm_need))
        steps = -(-n // (cores * tm))
        n_pad = cores * tm * steps

        if n_pad != n:
            pad = n_pad - n
            x_nc = jnp.concatenate([x_nc, jnp.zeros((pad, c), x_nc.dtype)], axis=0)
            y_flat = jnp.concatenate(
                [y_flat, jnp.full((pad,), ignore_index, jnp.int32)])
        y_col = y_flat.reshape(n_pad, 1)
        # pre-gather alpha[y] in the wrapper: removes a (tm,C)-wide select + lane
        # reduction from the kernel for ~4 extra HBM bytes/row.
        y_safe = jnp.clip(jnp.where(y_flat == ignore_index, 0, y_flat), 0, c - 1)
        alpha_y_col = alpha_vec[y_safe].reshape(n_pad, 1)

        est = tm * per_row + (2 << 20)
        vmem_limit = int(min(max(budget, int(est * 1.25)), int(cap * 0.9)))

        cost = pl.CostEstimate(
            flops=int(12 * n_pad * c),
            transcendentals=int(n_pad * (c + 2)),
            bytes_accessed=int(n_pad * c * itemsize + n_pad * 8
                               + 2 * cores * 128 * 4))

        # TODO(synk): for very large C (tens of thousands) a class-tiled online-LSE
        # (flash-style) variant would decouple tm from C; not implemented here —
        # tm is simply shrunk so the (tm, C) block fits the per-generation budget.
        kernel = functools.partial(_focal_rows_kernel, **static_args)
        loss_sum, cnt = pl.pallas_call(
            kernel,
            out_shape=(jax.ShapeDtypeStruct((1, cores * 128), jnp.float32),
                       jax.ShapeDtypeStruct((1, cores * 128), jnp.float32)),
            grid_spec=pltpu.PrefetchScalarGridSpec(
                num_scalar_prefetch=0,
                grid=(cores, steps),
                in_specs=[
                    pl.BlockSpec((tm, c), lambda core, i: (core * steps + i, 0)),
                    pl.BlockSpec((tm, 1), lambda core, i: (core * steps + i, 0)),
                    pl.BlockSpec((tm, 1), lambda core, i: (core * steps + i, 0)),
                ],
                out_specs=(
                    pl.BlockSpec((1, 128), lambda core, i: (0, core)),
                    pl.BlockSpec((1, 128), lambda core, i: (0, core)),
                ),
                scratch_shapes=[
                    pltpu.VMEM((tm, 1), jnp.float32),   # per-row loss accumulator
                    pltpu.VMEM((tm, 1), jnp.float32),   # per-row valid-count accumulator
                ],
            ),
            compiler_params=pltpu.CompilerParams(
                dimension_semantics=("parallel", "arbitrary"),
                vmem_limit_bytes=vmem_limit),
            cost_estimate=cost,
        )(x_nc, y_col, alpha_y_col)

    s = loss_sum.reshape(cores, 128)[:, 0].sum()
    k = cnt.reshape(cores, 128)[:, 0].sum()
    if reduction == "mean":
        # mean over VALID rows (the module filters ignored rows before .mean());
        # returns 0.0 when every label is ignore_index (module's len(y)==0 branch).
        return jnp.where(k > 0, s / jnp.maximum(k, 1.0), 0.0)
    else:  # "sum"
        return s


# --------------------------------------------------------------------------- #
# Self-test
# --------------------------------------------------------------------------- #
def _ref_focal(x, y, alpha, gamma, reduction, ignore_index=-100):
    if x.ndim > 2:
        c = x.shape[1]
        perm = (0,) + tuple(range(2, x.ndim)) + (1,)
        xf = jnp.transpose(x, perm).reshape(-1, c)
        yf = y.reshape(-1)
    else:
        xf, yf = x, y
        c = x.shape[1]
    mask = yf != ignore_index
    logp = jax.nn.log_softmax(xf.astype(jnp.float32), axis=-1)
    ys = jnp.clip(jnp.where(mask, yf, 0), 0, c - 1)
    logpt = logp[jnp.arange(xf.shape[0]), ys]
    pt = jnp.exp(logpt)
    ce = -alpha[ys] * logpt
    focal = (1.0 - pt) ** gamma
    loss = jnp.where(mask, focal * ce, 0.0)
    if reduction == "mean":
        return jnp.sum(loss) / jnp.maximum(jnp.sum(mask), 1)
    return jnp.sum(loss)


if __name__ == "__main__":
    key = jax.random.PRNGKey(0)
    ok = True

    # ---- Case 1: module's shipped shape (C=7 segmentation-style, small-C path) ----
    B, C, H, W = 2, 7, 16, 16
    k1, k2, k3, k4, k5 = jax.random.split(key, 5)
    x1 = jax.random.normal(k1, (B, C, H, W), jnp.float32)
    y1 = jax.random.randint(k2, (B, H, W), 0, C, jnp.int32)
    y1 = y1.at[0, 0, 0].set(-100)   # exercise ignore_index
    alpha1 = jnp.array([1.063, 4.468, 1.021, 0.441, 0.815, 1.406, 0.787], jnp.float32)

    for gamma, reduction in ((0.0, "mean"), (2.0, "mean"), (3.0, "mean"), (0.0, "sum")):
        out = jax.block_until_ready(
            focal_loss(x1, y1, alpha1, gamma=gamma, reduction=reduction,
                       ignore_index=-100))
        ref = _ref_focal(x1, y1, alpha1, gamma, reduction)
        if not jnp.allclose(out, ref, atol=1e-5, rtol=2e-5):
            ok = False
            print("MISMATCH small-C", gamma, reduction, float(out), float(ref))

    # ---- Case 2: larger class count (general rows-by-classes path) ----
    N2, C2 = 256, 48
    x2 = jax.random.normal(k3, (N2, C2), jnp.float32)
    y2 = jax.random.randint(k4, (N2,), 0, C2, jnp.int32)
    y2 = y2.at[:5].set(-100)
    alpha2 = jax.random.uniform(k5, (C2,), jnp.float32, 0.5, 2.0)

    for gamma, reduction in ((2.0, "mean"), (0.0, "sum")):
        out = jax.block_until_ready(
            focal_loss(x2, y2, alpha2, gamma=gamma, reduction=reduction,
                       ignore_index=-100))
        ref = _ref_focal(x2, y2, alpha2, gamma, reduction)
        if not jnp.allclose(out, ref, atol=1e-5, rtol=2e-5):
            ok = False
            print("MISMATCH general", gamma, reduction, float(out), float(ref))

    if ok:
        print("KERNEL_OK")
</pallas_src>

<mosaic_0001>
module attributes {stable_mosaic.version = 11 : i64} {
  func.func @_focal_cols_kernel(%arg0: i32, %arg1: i32, %arg2: memref<7x512xf32, #tpu.memory_space<vmem>>, %arg3: memref<1x512xi32, #tpu.memory_space<vmem>>, %arg4: memref<7x1xf32, #tpu.memory_space<vmem>>, %arg5: memref<1x128xf32, #tpu.memory_space<vmem>>, %arg6: memref<1x128xf32, #tpu.memory_space<vmem>>, %arg7: memref<1x512xf32, #tpu.memory_space<vmem>>, %arg8: memref<1x512xf32, #tpu.memory_space<vmem>>) attributes {dimension_semantics = [#tpu.dimension_semantics<parallel>, #tpu.dimension_semantics<arbitrary>], iteration_bounds = array<i64: 1, 1>, scalar_prefetch = 0 : i64, scratch_operands = 2 : i64, tpu.core_type = #tpu.core_type<tc>, window_params = [{transform_indices = @transform_0, window_bounds = array<i64: 7, 512>}, {transform_indices = @transform_1, window_bounds = array<i64: 1, 512>}, {pipeline_mode = #tpu.pipeline_mode<synchronous>, transform_indices = @transform_2, window_bounds = array<i64: 7, 1>}, {transform_indices = @transform_3, window_bounds = array<i64: 1, 128>}, {transform_indices = @transform_4, window_bounds = array<i64: 1, 128>}]} {
    %c0_i32 = arith.constant 0 : i32
    %0 = arith.cmpi eq, %arg1, %c0_i32 : i32
    %1 = arith.extui %0 : i1 to i32
    %c0_i32_0 = arith.constant 0 : i32
    %2 = arith.cmpi ne, %1, %c0_i32_0 : i32
    scf.if %2 {
      %cst_25 = arith.constant 0.000000e+00 : f32
      %52 = vector.broadcast %cst_25 : f32 to vector<1x512xf32>
      %c0_26 = arith.constant 0 : index
      %c0_27 = arith.constant 0 : index
      %53 = vector.load %arg7[%c0_26, %c0_27] : memref<1x512xf32, #tpu.memory_space<vmem>>, vector<1x512xf32>
      tpu.vector_store %arg7[%c0_26, %c0_27], %52 {strides = array<i32>} : memref<1x512xf32, #tpu.memory_space<vmem>>, vector<1x512xf32>,
      %cst_28 = arith.constant 0.000000e+00 : f32
      %54 = vector.broadcast %cst_28 : f32 to vector<1x512xf32>
      %c0_29 = arith.constant 0 : index
      %c0_30 = arith.constant 0 : index
      %55 = vector.load %arg8[%c0_29, %c0_30] : memref<1x512xf32, #tpu.memory_space<vmem>>, vector<1x512xf32>
      tpu.vector_store %arg8[%c0_29, %c0_30], %54 {strides = array<i32>} : memref<1x512xf32, #tpu.memory_space<vmem>>, vector<1x512xf32>,
    } else {
    }
    %c0 = arith.constant 0 : index
    %c0_1 = arith.constant 0 : index
    %3 = vector.load %arg2[%c0, %c0_1] : memref<7x512xf32, #tpu.memory_space<vmem>>, vector<7x512xf32>
    %c0_2 = arith.constant 0 : index
    %c0_3 = arith.constant 0 : index
    %4 = vector.load %arg3[%c0_2, %c0_3] : memref<1x512xi32, #tpu.memory_space<vmem>>, vector<1x512xi32>
    %c0_4 = arith.constant 0 : index
    %c0_5 = arith.constant 0 : index
    %5 = vector.load %arg4[%c0_4, %c0_5] : memref<7x1xf32, #tpu.memory_space<vmem>>, vector<7x1xf32>
    %cst = arith.constant dense<0xFF800000> : vector<512xf32>
    %6 = vector.multi_reduction <maximumf>, %3, %cst [0] : vector<7x512xf32> to vector<512xf32>
    %7 = vector.shape_cast %6 : vector<512xf32> to vector<1x512xf32>
    %8 = vector.broadcast %7 : vector<1x512xf32> to vector<7x512xf32>
    %9 = arith.subf %3, %8 : vector<7x512xf32>
    %10 = math.exp %9 : vector<7x512xf32>
    %cst_6 = arith.constant dense<0.000000e+00> : vector<512xf32>
    %11 = vector.multi_reduction <add>, %10, %cst_6 [0] : vector<7x512xf32> to vector<512xf32>
    %12 = vector.shape_cast %11 : vector<512xf32> to vector<1x512xf32>
    %13 = math.log %12 : vector<1x512xf32>
    %14 = arith.addf %13, %7 : vector<1x512xf32>
    %c-100_i32 = arith.constant -100 : i32
    %15 = vector.broadcast %c-100_i32 : i32 to vector<1x512xi32>
    %16 = arith.cmpi ne, %4, %15 : vector<1x512xi32>
    %c0_i32_7 = arith.constant 0 : i32
    %17 = vector.broadcast %c0_i32_7 : i32 to vector<1x512xi32>
    %18 = arith.select %16, %4, %17 : vector<1x512xi1>, vector<1x512xi32>
    %19 = tpu.iota {dimensions = array<i32: 0>} : vector<7x1xi32>
    %20 = vector.broadcast %19 : vector<7x1xi32> to vector<7x512xi32>
    %21 = vector.broadcast %18 : vector<1x512xi32> to vector<7x512xi32>
    %22 = arith.cmpi eq, %20, %21 : vector<7x512xi32>
    %cst_8 = arith.constant 0.000000e+00 : f32
    %23 = vector.broadcast %cst_8 : f32 to vector<7x512xf32>
    %24 = arith.select %22, %3, %23 : vector<7x512xi1>, vector<7x512xf32>
    %cst_9 = arith.constant dense<0.000000e+00> : vector<512xf32>
    %25 = vector.multi_reduction <add>, %24, %cst_9 [0] : vector<7x512xf32> to vector<512xf32>
    %26 = vector.shape_cast %25 : vector<512xf32> to vector<1x512xf32>
    %cst_10 = arith.constant 0.000000e+00 : f32
    %27 = vector.shape_cast %5 : vector<7x1xf32> to vector<7x1xf32>
    %28 = vector.broadcast %27 : vector<7x1xf32> to vector<7x512xf32>
    %29 = vector.broadcast %cst_10 : f32 to vector<7x512xf32>
    %30 = arith.select %22, %28, %29 : vector<7x512xi1>, vector<7x512xf32>
    %cst_11 = arith.constant dense<0.000000e+00> : vector<512xf32>
    %31 = vector.multi_reduction <add>, %30, %cst_11 [0] : vector<7x512xf32> to vector<512xf32>
    %32 = vector.shape_cast %31 : vector<512xf32> to vector<1x512xf32>
    %33 = arith.subf %26, %14 : vector<1x512xf32>
    %cst_12 = arith.constant 0.000000e+00 : f32
    %34 = vector.broadcast %cst_12 : f32 to vector<1x512xf32>
    %35 = arith.minimumf %33, %34 : vector<1x512xf32>
    %cst_13 = arith.constant 0.000000e+00 : f32
    %36 = vector.broadcast %cst_13 : f32 to vector<1x512xf32>
    %37 = arith.subf %36, %32 : vector<1x512xf32>
    %38 = arith.mulf %37, %35 : vector<1x512xf32>
    %c0_14 = arith.constant 0 : index
    %c0_15 = arith.constant 0 : index
    %39 = vector.load %arg7[%c0_14, %c0_15] : memref<1x512xf32, #tpu.memory_space<vmem>>, vector<1x512xf32>
    %cst_16 = arith.constant 0.000000e+00 : f32
    %40 = vector.broadcast %cst_16 : f32 to vector<1x512xf32>
    %41 = arith.select %16, %38, %40 : vector<1x512xi1>, vector<1x512xf32>
    %42 = arith.addf %39, %41 : vector<1x512xf32>
    %c0_17 = arith.constant 0 : index
    %c0_18 = arith.constant 0 : index
    %43 = vector.load %arg7[%c0_17, %c0_18] : memref<1x512xf32, #tpu.memory_space<vmem>>, vector<1x512xf32>
    tpu.vector_store %arg7[%c0_17, %c0_18], %42 {strides = array<i32>} : memref<1x512xf32, #tpu.memory_space<vmem>>, vector<1x512xf32>,
    %c0_19 = arith.constant 0 : index
    %c0_20 = arith.constant 0 : index
    %44 = vector.load %arg8[%c0_19, %c0_20] : memref<1x512xf32, #tpu.memory_space<vmem>>, vector<1x512xf32>
    %45 = arith.extui %16 : vector<1x512xi1> to vector<1x512xi32>
    %46 = arith.sitofp %45 : vector<1x512xi32> to vector<1x512xf32>
    %47 = arith.addf %44, %46 : vector<1x512xf32>
    %c0_21 = arith.constant 0 : index
    %c0_22 = arith.constant 0 : index
    %48 = vector.load %arg8[%c0_21, %c0_22] : memref<1x512xf32, #tpu.memory_space<vmem>>, vector<1x512xf32>
    tpu.vector_store %arg8[%c0_21, %c0_22], %47 {strides = array<i32>} : memref<1x512xf32, #tpu.memory_space<vmem>>, vector<1x512xf32>,
    %c0_i32_23 = arith.constant 0 : i32
    %49 = arith.cmpi eq, %arg1, %c0_i32_23 : i32
    %50 = arith.extui %49 : i1 to i32
    %c0_i32_24 = arith.constant 0 : i32
    %51 = arith.cmpi ne, %50, %c0_i32_24 : i32
    scf.if %51 {
      %cst_25 = arith.constant 0.000000e+00 : f32
      %52 = vector.broadcast %cst_25 : f32 to vector<1x128xf32>
      %c0_26 = arith.constant 0 : index
      %c0_27 = arith.constant 0 : index
      %53 = vector.load %arg7[%c0_26, %c0_27] : memref<1x512xf32, #tpu.memory_space<vmem>>, vector<1x512xf32>
      %54 = vector.shape_cast %53 : vector<1x512xf32> to vector<1x1x512xf32>
      %cst_28 = arith.constant dense<0.000000e+00> : vector<1xf32>
      %55 = vector.multi_reduction <add>, %54, %cst_28 [1, 2] : vector<1x1x512xf32> to vector<1xf32>
      %56 = vector.shape_cast %55 : vector<1xf32> to vector<1x1x1xf32>
      %57 = vector.extract %56[0, 0, 0] : f32 from vector<1x1x1xf32>
      %58 = vector.broadcast %57 : f32 to vector<1x128xf32>
      %59 = arith.addf %52, %58 : vector<1x128xf32>
      %c0_29 = arith.constant 0 : index
      %c0_30 = arith.constant 0 : index
      %60 = vector.load %arg5[%c0_29, %c0_30] : memref<1x128xf32, #tpu.memory_space<vmem>>, vector<1x128xf32>
      tpu.vector_store %arg5[%c0_29, %c0_30], %59 {strides = array<i32>} : memref<1x128xf32, #tpu.memory_space<vmem>>, vector<1x128xf32>,
      %cst_31 = arith.constant 0.000000e+00 : f32
      %61 = vector.broadcast %cst_31 : f32 to vector<1x128xf32>
      %c0_32 = arith.constant 0 : index
      %c0_33 = arith.constant 0 : index
      %62 = vector.load %arg8[%c0_32, %c0_33] : memref<1x512xf32, #tpu.memory_space<vmem>>, vector<1x512xf32>
      %63 = vector.shape_cast %62 : vector<1x512xf32> to vector<1x1x512xf32>
      %cst_34 = arith.constant dense<0.000000e+00> : vector<1xf32>
      %64 = vector.multi_reduction <add>, %63, %cst_34 [1, 2] : vector<1x1x512xf32> to vector<1xf32>
      %65 = vector.shape_cast %64 : vector<1xf32> to vector<1x1x1xf32>
      %66 = vector.extract %65[0, 0, 0] : f32 from vector<1x1x1xf32>
      %67 = vector.broadcast %66 : f32 to vector<1x128xf32>
      %68 = arith.addf %61, %67 : vector<1x128xf32>
      %c0_35 = arith.constant 0 : index
      %c0_36 = arith.constant 0 : index
      %69 = vector.load %arg6[%c0_35, %c0_36] : memref<1x128xf32, #tpu.memory_space<vmem>>, vector<1x128xf32>
      tpu.vector_store %arg6[%c0_35, %c0_36], %68 {strides = array<i32>} : memref<1x128xf32, #tpu.memory_space<vmem>>, vector<1x128xf32>,
    } else {
    }
    return
  }
  func.func @transform_0(%arg0: i32, %arg1: i32) -> (i32, i32) {
    %c1_i32 = arith.constant 1 : i32
    %0 = arith.muli %arg0, %c1_i32 : i32
    %1 = arith.addi %0, %arg1 : i32
    %c0_i32 = arith.constant 0 : i32
    %c0_i32_0 = arith.constant 0 : i32
    return %c0_i32, %1 : i32, i32
  }
  func.func @transform_1(%arg0: i32, %arg1: i32) -> (i32, i32) {
    %c1_i32 = arith.constant 1 : i32
    %0 = arith.muli %arg0, %c1_i32 : i32
    %1 = arith.addi %0, %arg1 : i32
    %c0_i32 = arith.constant 0 : i32
    %c0_i32_0 = arith.constant 0 : i32
    return %c0_i32, %1 : i32, i32
  }
  func.func @transform_2(%arg0: i32, %arg1: i32) -> (i32, i32) {
    %c0_i32 = arith.constant 0 : i32
    %c0_i32_0 = arith.constant 0 : i32
    %c0_i32_1 = arith.constant 0 : i32
    return %c0_i32, %c0_i32_0 : i32, i32
  }
  func.func @transform_3(%arg0: i32, %arg1: i32) -> (i32, i32) {
    %c0_i32 = arith.constant 0 : i32
    %c0_i32_0 = arith.constant 0 : i32
    return %c0_i32, %arg0 : i32, i32
  }
  func.func @transform_4(%arg0: i32, %arg1: i32) -> (i32, i32) {
    %c0_i32 = arith.constant 0 : i32
    %c0_i32_0 = arith.constant 0 : i32
    return %c0_i32, %arg0 : i32, i32
  }
}

</mosaic_0001>

<llo_original>
// kernel: tpu_custom_call.1
$region0: #{tpu_custom_call.1}
  #allocation0 [shape = 'u32[]', space=smem, size = 0x4, offset = 0x4, fixed_abs, tag = 'smem constant byte address 0x4 - core index']
  #allocation1 [shape = 'u32[144,128]{1,0:T(1,128)}', space=vmem, size = 0x12000, scoped, tag = 'internal scratch']
  #allocation2 [shape = 'f32[1,512]{1,0:T(1,128)}', space=vmem, size = 0x800, scoped, tag = 'scratch operand']
  #allocation3 [shape = 'f32[1,512]{1,0:T(1,128)}', space=vmem, size = 0x800, scoped, tag = 'scratch operand']
  %s0 = inlined_call_operand.hbm [shape: f32[7,512], index: 0, kind: input, shape index: {}]
  %s1 = inlined_call_operand.vmem [shape: s32[1,512], index: 1, kind: input, shape index: {}]
  %s2 = inlined_call_operand.vmem [shape: f32[7,1], index: 2, kind: input, shape index: {}]
  %s3 = inlined_call_operand.hbm [shape: f32[1,128], index: 3, kind: output, shape index: {0}]
  %s4 = inlined_call_operand.hbm [shape: f32[1,128], index: 4, kind: output, shape index: {1}]
  %5 = xla_tuple %s3, %s4
  %s6 = sld [smem:[#allocation0]]
  $region42: #{tpu_custom_call.1} parent=0
    _
  %s8 = ssub.s32 1, %s6
  %s9 = scalar_select 0, %s8, %s6
  $region1: #{tpu_custom_call.1} parent=0
    #allocation4 [shape = 'u8[16384]{0}', space=vmem, size = 0x4000, scoped, tag = 'input window, operand 0, single buffered']
    #allocation5 [shape = 's32[1]{0}', space=sflag, size = 0x4, scoped, tag = 'scoped memory for tpu_custom_call.1']
    #allocation6 [shape = 's32[1]{0}', space=sflag, size = 0x4, scoped, tag = 'scoped memory for tpu_custom_call.1']
    #allocation7 [shape = 'u8[512]{0}', space=vmem, size = 0x400, scoped, tag = 'output window, operand 0, single buffered']
    #allocation8 [shape = 'u8[512]{0}', space=vmem, size = 0x400, scoped, tag = 'output window, operand 1, single buffered']
    #allocation9 [shape = 's32[1]{0}', space=sflag, size = 0x4, scoped, tag = 'scoped memory for tpu_custom_call.1']
    %10 = vsyncpa [#allocation5], 0
    %11 = vsyncpa [#allocation6], 0
    %12 = vsyncpa [#allocation9], 0
    // Predicated region
    $region2: #{tpu_custom_call.1} parent=1 // pred_check
      _
    $region3: #{tpu_custom_call.1} parent=1 // pred_check_branch
      %14 = sbr.rel (0) target = $region5
    $region4: #{tpu_custom_call.1} parent=1 // pred_region
      %s15 = sadd.s32 0, 0
      %s16 = smul.u32 4, %s15
      %s18 = ssub.s32 512, 512
      %19 = vsyncadd [#allocation5], %s18
      %s20 = smul.addr %s16, 128
      %s21 = scalar_lea.hbm %s0, %s20
      %s23 = sshll.u32 [#allocation4], 4
      %s24 = int_to_ptr.vmem [resolvable:$true] %s23
      %26 = dma.hbm_to_vmem [thread:$0]  %s21, 512, %s24, [#allocation5]
    $region5: #{tpu_custom_call.1} parent=1 // pred_fallthru
      _
    // Predicated region
    $region6: #{tpu_custom_call.1} parent=1 // pred_check
      _
    $region7: #{tpu_custom_call.1} parent=1 // pred_check_branch
      %28 = sbr.rel (0) target = $region9
    $region8: #{tpu_custom_call.1} parent=1 // pred_region
      %s29 = sadd.s32 0, 0
      %s30 = smul.u32 4, %s29
      %p31 = scmp.lt.s32.totalorder %s30, 3
      %s32 = scalar_select %p31, %s30, 3
      %s33 = scalar_lea.vmem %s1, %s32
      %s34 = sadd.s32 0, 0
      %s35 = smul.u32 4, %s34
    $region9: #{tpu_custom_call.1} parent=1 // pred_fallthru
      _
    // Predicated region
    $region10: #{tpu_custom_call.1} parent=1 // pred_check
      _
    $region11: #{tpu_custom_call.1} parent=1 // pred_check_branch
      %37 = sbr.rel (0) target = $region13
    $region12: #{tpu_custom_call.1} parent=1 // pred_region
      _
    $region13: #{tpu_custom_call.1} parent=1 // pred_fallthru
      _
    // Predicated region
    $region14: #{tpu_custom_call.1} parent=1 // pred_check
      _
    $region15: #{tpu_custom_call.1} parent=1 // pred_check_branch
      %39 = sbr.rel (0) target = $region17
    $region16: #{tpu_custom_call.1} parent=1 // pred_region
      %40 = dma.done [#allocation5], 512
    $region17: #{tpu_custom_call.1} parent=1 // pred_fallthru
      _
    %s41 = sadd.s32 0, 0
    %s42 = smul.u32 4, %s41
    %p43 = scmp.lt.s32.totalorder %s42, 3
    %s44 = scalar_select %p43, %s42, 3
    %s45 = scalar_lea.vmem %s1, %s44
    %s46 = sadd.s32 0, 0
    %s47 = smul.u32 4, %s46
    %s48 = sadd.s32 0, 0
    %s49 = smul.u32 4, %s48
    %p50 = scmp.lt.s32.totalorder %s49, 3
    %s51 = scalar_select %p50, %s49, 3
    %s52 = scalar_lea.vmem %s1, %s51
    %s53 = sadd.s32 0, 0
    %s54 = smul.u32 4, %s53
    %p55 = scmp.eq.s32.totalorder 0, 0
    // Predicated region
    $region18: #{tpu_custom_call.1} parent=1 // pred_check
      %p56 = pneg %p55
    $region19: #{tpu_custom_call.1} parent=1 // pred_check_branch
      %58 = sbr.rel (%p56) target = $region21
    $region20: #{tpu_custom_call.1} parent=1 // pred_region
      %v59 = vlaneseq
      %vm60 = vcmp.ge.s32.totalorder %v59, 0
      %vm61 = vcmp.lt.s32.totalorder %v59, 512
      %vm62 = vmand %vm60, %vm61
      %63 = vst.msk [vmem:[#allocation2] sm:$0xf] %vm62, 0.0
      %64 = vst.msk [vmem:[#allocation3] sm:$0xf] %vm62, 0.0
    $region21: #{tpu_custom_call.1} parent=1 // pred_fallthru
      _
    %v65 = vld [vmem:[#allocation4] sm:$0x7f]
    %v66 = vld [vmem:[#allocation4 + $0x8] sm:$0x7f]
    %v67 = vld [vmem:[#allocation4 + $0x10] sm:$0x7f]
    %v68 = vld [vmem:[#allocation4 + $0x18] sm:$0x7f]
    %v69 = vld [vmem:[%s52] sm:$0xf]
    %v70 = vld [vmem:[%s2] sm:$0x7f]
    %vm71 = vcmask 1046528
    %v72 = vsel %vm71, %v65, -inf
    %v73 = vrot.slane %v72, 4
    %v74 = vmax.f32 %v72, %v73
    %v75 = vrot.slane %v74, 2
    %v76 = vmax.f32 %v74, %v75
    %v77 = vrot.slane %v76, 1
    %v78 = vmax.f32 %v76, %v77
    %v79 = vsel %vm71, %v66, -inf
    %v80 = vrot.slane %v79, 4
    %v81 = vmax.f32 %v79, %v80
    %v82 = vrot.slane %v81, 2
    %v83 = vmax.f32 %v81, %v82
    %v84 = vrot.slane %v83, 1
    %v85 = vmax.f32 %v83, %v84
    %v86 = vsel %vm71, %v67, -inf
    %v87 = vrot.slane %v86, 4
    %v88 = vmax.f32 %v86, %v87
    %v89 = vrot.slane %v88, 2
    %v90 = vmax.f32 %v88, %v89
    %v91 = vrot.slane %v90, 1
    %v92 = vmax.f32 %v90, %v91
    %v93 = vsel %vm71, %v68, -inf
    %v94 = vrot.slane %v93, 4
    %v95 = vmax.f32 %v93, %v94
    %v96 = vrot.slane %v95, 2
    %v97 = vmax.f32 %v95, %v96
    %v98 = vrot.slane %v97, 1
    %v99 = vmax.f32 %v97, %v98
    %v100 = vsub.f32 %v65, %v78
    %v101 = vsub.f32 %v66, %v85
    %v102 = vsub.f32 %v67, %v92
    %v103 = vsub.f32 %v68, %v99
    %v104 = vmul.f32 %v100, 1.442695
    %v105 = vpow.pop %v104
    %v106 = vmul.f32 %v101, 1.442695
    %v107 = vpow.pop %v106
    %v108 = vmul.f32 %v102, 1.442695
    %v109 = vpow.pop %v108
    %v110 = vmul.f32 %v103, 1.442695
    %v111 = vpow.pop %v110
    %v112 = vsel %vm71, %v105, 0.0
    %v113 = vrot.slane %v112, 4
    %v114 = vadd.f32 %v112, %v113
    %v115 = vrot.slane %v114, 2
    %v116 = vadd.f32 %v114, %v115
    %v117 = vrot.slane %v116, 1
    %v118 = vadd.f32 %v116, %v117
    %v119 = vsel %vm71, %v107, 0.0
    %v120 = vrot.slane %v119, 4
    %v121 = vadd.f32 %v119, %v120
    %v122 = vrot.slane %v121, 2
    %v123 = vadd.f32 %v121, %v122
    %v124 = vrot.slane %v123, 1
    %v125 = vadd.f32 %v123, %v124
    %v126 = vsel %vm71, %v109, 0.0
    %v127 = vrot.slane %v126, 4
    %v128 = vadd.f32 %v126, %v127
    %v129 = vrot.slane %v128, 2
    %v130 = vadd.f32 %v128, %v129
    %v131 = vrot.slane %v130, 1
    %v132 = vadd.f32 %v130, %v131
    %v133 = vsel %vm71, %v111, 0.0
    %v134 = vrot.slane %v133, 4
    %v135 = vadd.f32 %v133, %v134
    %v136 = vrot.slane %v135, 2
    %v137 = vadd.f32 %v135, %v136
    %v138 = vrot.slane %v137, 1
    %v139 = vadd.f32 %v137, %v138
    %v140 = vlog2.pop %v118
    %v141 = vmul.f32 %v140, 0.6931472
    %v142 = vlog2.pop %v125
    %v143 = vmul.f32 %v142, 0.6931472
    %v144 = vlog2.pop %v132
    %v145 = vmul.f32 %v144, 0.6931472
    %v146 = vlog2.pop %v139
    %v147 = vmul.f32 %v146, 0.6931472
    %v148 = vadd.f32 %v141, %v78
    %v149 = vadd.f32 %v143, %v85
    %v150 = vadd.f32 %v145, %v92
    %v151 = vadd.f32 %v147, %v99
    %vm152 = vcmp.ne.s32.totalorder %v69, 4294967196
    %v153 = vsel %vm152, %v69, 0
    %v154 = vlaneseq
    %v155 = vshrl.u32 %v154, 7
    %v156 = vlaneseq
    %v157 = vshrl.u32 %v156, 7
    %v158 = vsub.s32 0, %v157
    %v159 = vrot.slane %v153, %v158
    %v160 = vlaneseq
    %v161 = vshrl.u32 %v160, 7
    %v162 = vsub.s32 1, %v161
    %v163 = vrot.slane %v153, %v162
    %v164 = vlaneseq
    %v165 = vshrl.u32 %v164, 7
    %v166 = vsub.s32 2, %v165
    %v167 = vrot.slane %v153, %v166
    %v168 = vlaneseq
    %v169 = vshrl.u32 %v168, 7
    %v170 = vsub.s32 3, %v169
    %v171 = vrot.slane %v153, %v170
    %vm172 = vcmp.eq.s32.totalorder %v155, %v159
    %vm173 = vcmp.eq.s32.totalorder %v155, %v163
    %vm174 = vcmp.eq.s32.totalorder %v155, %v167
    %vm175 = vcmp.eq.s32.totalorder %v155, %v171
    %v176 = vsel %vm172, %v65, 0.0
    %v177 = vsel %vm173, %v66, 0.0
    %v178 = vsel %vm174, %v67, 0.0
    %v179 = vsel %vm175, %v68, 0.0
    %v180 = vsel %vm71, %v176, 0.0
    %v181 = vrot.slane %v180, 4
    %v182 = vadd.f32 %v180, %v181
    %v183 = vrot.slane %v182, 2
    %v184 = vadd.f32 %v182, %v183
    %v185 = vrot.slane %v184, 1
    %v186 = vadd.f32 %v184, %v185
    %v187 = vsel %vm71, %v177, 0.0
    %v188 = vrot.slane %v187, 4
    %v189 = vadd.f32 %v187, %v188
    %v190 = vrot.slane %v189, 2
    %v191 = vadd.f32 %v189, %v190
    %v192 = vrot.slane %v191, 1
    %v193 = vadd.f32 %v191, %v192
    %v194 = vsel %vm71, %v178, 0.0
    %v195 = vrot.slane %v194, 4
    %v196 = vadd.f32 %v194, %v195
    %v197 = vrot.slane %v196, 2
    %v198 = vadd.f32 %v196, %v197
    %v199 = vrot.slane %v198, 1
    %v200 = vadd.f32 %v198, %v199
    %v201 = vsel %vm71, %v179, 0.0
    %v202 = vrot.slane %v201, 4
    %v203 = vadd.f32 %v201, %v202
    %v204 = vrot.slane %v203, 2
    %v205 = vadd.f32 %v203, %v204
    %v206 = vrot.slane %v205, 1
    %v207 = vadd.f32 %v205, %v206
    %209 = vset.pattern.permute.xlu0 0
    %210 = vperm.xlu0 %209, %v70
    %v211 = vpop.permute.xlu0 %210
    %v213 = vsel %vm172, %v211, 0.0
    %v214 = vsel %vm173, %v211, 0.0
    %v215 = vsel %vm174, %v211, 0.0
    %v216 = vsel %vm175, %v211, 0.0
    %v217 = vsel %vm71, %v213, 0.0
    %v218 = vrot.slane %v217, 4
    %v219 = vadd.f32 %v217, %v218
    %v220 = vrot.slane %v219, 2
    %v221 = vadd.f32 %v219, %v220
    %v222 = vrot.slane %v221, 1
    %v223 = vadd.f32 %v221, %v222
    %v224 = vsel %vm71, %v214, 0.0
    %v225 = vrot.slane %v224, 4
    %v226 = vadd.f32 %v224, %v225
    %v227 = vrot.slane %v226, 2
    %v228 = vadd.f32 %v226, %v227
    %v229 = vrot.slane %v228, 1
    %v230 = vadd.f32 %v228, %v229
    %v231 = vsel %vm71, %v215, 0.0
    %v232 = vrot.slane %v231, 4
    %v233 = vadd.f32 %v231, %v232
    %v234 = vrot.slane %v233, 2
    %v235 = vadd.f32 %v233, %v234
    %v236 = vrot.slane %v235, 1
    %v237 = vadd.f32 %v235, %v236
    %v238 = vsel %vm71, %v216, 0.0
    %v239 = vrot.slane %v238, 4
    %v240 = vadd.f32 %v238, %v239
    %v241 = vrot.slane %v240, 2
    %v242 = vadd.f32 %v240, %v241
    %v243 = vrot.slane %v242, 1
    %v244 = vadd.f32 %v242, %v243
    %v245 = vsub.f32 %v186, %v148
    %v246 = vsub.f32 %v193, %v149
    %v247 = vsub.f32 %v200, %v150
    %v248 = vsub.f32 %v207, %v151
    %v249 = vmin.f32 %v245, 0.0
    %v250 = vmin.f32 %v246, 0.0
    %v251 = vmin.f32 %v247, 0.0
    %v252 = vmin.f32 %v248, 0.0
    %v253 = vsub.f32 0.0, %v223
    %v254 = vsub.f32 0.0, %v230
    %v255 = vsub.f32 0.0, %v237
    %v256 = vsub.f32 0.0, %v244
    %v257 = vmul.f32 %v253, %v249
    %v258 = vmul.f32 %v254, %v250
    %v259 = vmul.f32 %v255, %v251
    %v260 = vmul.f32 %v256, %v252
    %v261 = vld [vmem:[#allocation2] sm:$0xf]
    %v266 = vcombine.low %v257, %v258
    %v267 = vcombine.low %v259, %v260
    %v269 = vunpack.c.l.s4 1966171168
    %v270 = vunpack.c.0.s8 %v269
    %v271 = vlaneseq
    %v272 = vshrl.u32 %v271, 7
    %v273 = vsub.s32 %v270, %v272
    %v274 = vrot.slane %v266, %v273
    %v276 = vunpack.c.l.s4 1966171168
    %v277 = vunpack.c.0.s8 %v276
    %v278 = vlaneseq
    %v279 = vshrl.u32 %v278, 7
    %v280 = vsub.s32 %v277, %v279
    %v281 = vrot.slane %v267, %v280
    %v282 = vcombine.low %v274, %v281
    %v284 = vunpack.c.l.s4 1966171168
    %v285 = vunpack.c.0.s8 %v284
    %v286 = vlaneseq
    %v287 = vshrl.u32 %v286, 7
    %v288 = vsub.s32 %v285, %v287
    %v289 = vrot.slane %v282, %v288
    %v291 = vsel %vm152, %v289, 0.0
    %v292 = vadd.f32 %v261, %v291
    %v293 = vlaneseq
    %vm294 = vcmp.ge.s32.totalorder %v293, 0
    %vm295 = vcmp.lt.s32.totalorder %v293, 512
    %vm296 = vmand %vm294, %vm295
    %297 = vst.msk [vmem:[#allocation2] sm:$0xf] %vm296, %v292
    %v298 = vld [vmem:[#allocation3] sm:$0xf]
    %v299 = vsel %vm152, 1, 0
    %v300 = vcvt.s32.f32 %v299
    %v301 = vadd.f32 %v298, %v300
    %302 = vst.msk [vmem:[#allocation3] sm:$0xf] %vm296, %v301
    // Predicated region
    $region22: #{tpu_custom_call.1} parent=1 // pred_check
      %p303 = pneg %p55
    $region23: #{tpu_custom_call.1} parent=1 // pred_check_branch
      %305 = sbr.rel (%p303) target = $region25
    $region24: #{tpu_custom_call.1} parent=1 // pred_region
      %v306 = vld [vmem:[#allocation2] sm:$0xf]
      %v308 = vlaneseq
      %v309 = vshrl.u32 %v308, 7
      %v310 = vsub.s32 0, %v309
      %v311 = vrot.slane %v306, %v310
      %v312 = vlaneseq
      %v313 = vshrl.u32 %v312, 7
      %v314 = vsub.s32 1, %v313
      %v315 = vrot.slane %v306, %v314
      %v316 = vlaneseq
      %v317 = vshrl.u32 %v316, 7
      %v318 = vsub.s32 2, %v317
      %v319 = vrot.slane %v306, %v318
      %v320 = vlaneseq
      %v321 = vshrl.u32 %v320, 7
      %v322 = vsub.s32 3, %v321
      %v323 = vrot.slane %v306, %v322
      %vm328 = vcmask 1040384
      %v329 = vsel %vm328, %v311, 0.0
      %v330 = vsel %vm328, %v315, 0.0
      %v331 = vadd.f32 %v329, %v330
      %v332 = vsel %vm328, %v319, 0.0
      %v333 = vadd.f32 %v331, %v332
      %v334 = vsel %vm328, %v323, 0.0
      %v335 = vadd.f32 %v333, %v334
      %336 = vadd.xlane.f32.xlu0 %v335
      %v337 = vpop.xlane.xlu0 %336
      %v338 = vrot.slane %v337, 4
      %v339 = vadd.f32 %v337, %v338
      %v340 = vrot.slane %v339, 2
      %v341 = vadd.f32 %v339, %v340
      %v342 = vrot.slane %v341, 1
      %v343 = vadd.f32 %v341, %v342
      %s344 = vtos %v343
      %v345 = vstv %s344
      %v346 = vadd.f32 %v345, 0.0
      %347 = vst [vmem:[#allocation7] sm:$0x1] %v346
      %v348 = vld [vmem:[#allocation3] sm:$0xf]
      %v350 = vlaneseq
      %v351 = vshrl.u32 %v350, 7
      %v352 = vsub.s32 0, %v351
      %v353 = vrot.slane %v348, %v352
      %v354 = vlaneseq
      %v355 = vshrl.u32 %v354, 7
      %v356 = vsub.s32 1, %v355
      %v357 = vrot.slane %v348, %v356
      %v358 = vlaneseq
      %v359 = vshrl.u32 %v358, 7
      %v360 = vsub.s32 2, %v359
      %v361 = vrot.slane %v348, %v360
      %v362 = vlaneseq
      %v363 = vshrl.u32 %v362, 7
      %v364 = vsub.s32 3, %v363
      %v365 = vrot.slane %v348, %v364
      %v370 = vsel %vm328, %v353, 0.0
      %v371 = vsel %vm328, %v357, 0.0
      %v372 = vadd.f32 %v370, %v371
      %v373 = vsel %vm328, %v361, 0.0
      %v374 = vadd.f32 %v372, %v373
      %v375 = vsel %vm328, %v365, 0.0
      %v376 = vadd.f32 %v374, %v375
      %377 = vadd.xlane.f32.xlu0 %v376
      %v378 = vpop.xlane.xlu0 %377
      %v379 = vrot.slane %v378, 4
      %v380 = vadd.f32 %v378, %v379
      %v381 = vrot.slane %v380, 2
      %v382 = vadd.f32 %v380, %v381
      %v383 = vrot.slane %v382, 1
      %v384 = vadd.f32 %v382, %v383
      %s385 = vtos %v384
      %v386 = vstv %s385
      %v387 = vadd.f32 %v386, 0.0
      %388 = vst [vmem:[#allocation8] sm:$0x1] %v387
    $region25: #{tpu_custom_call.1} parent=1 // pred_fallthru
      _
    // Predicated region
    $region26: #{tpu_custom_call.1} parent=1 // pred_check
      _
    $region27: #{tpu_custom_call.1} parent=1 // pred_check_branch
      %390 = sbr.rel (0) target = $region29
    $region28: #{tpu_custom_call.1} parent=1 // pred_region
      %s392 = ssub.s32 16, 16
      %393 = vsyncadd [#allocation6], %s392
      %s395 = sshll.u32 [#allocation7], 4
      %s396 = int_to_ptr.vmem [resolvable:$true] %s395
      %398 = dma.vmem_to_hbm [thread:$0]  %s396, 16, %s3, [#allocation6]
    $region29: #{tpu_custom_call.1} parent=1 // pred_fallthru
      _
    // Predicated region
    $region30: #{tpu_custom_call.1} parent=1 // pred_check
      _
    $region31: #{tpu_custom_call.1} parent=1 // pred_check_branch
      %400 = sbr.rel (0) target = $region33
    $region32: #{tpu_custom_call.1} parent=1 // pred_region
      %s402 = ssub.s32 16, 16
      %403 = vsyncadd [#allocation9], %s402
      %s405 = sshll.u32 [#allocation8], 4
      %s406 = int_to_ptr.vmem [resolvable:$true] %s405
      %408 = dma.vmem_to_hbm [thread:$0]  %s406, 16, %s4, [#allocation9]
    $region33: #{tpu_custom_call.1} parent=1 // pred_fallthru
      _
    // Predicated region
    $region34: #{tpu_custom_call.1} parent=1 // pred_check
      _
    $region35: #{tpu_custom_call.1} parent=1 // pred_check_branch
      %410 = sbr.rel (0) target = $region37
    $region36: #{tpu_custom_call.1} parent=1 // pred_region
      %411 = dma.done [#allocation6], 16
    $region37: #{tpu_custom_call.1} parent=1 // pred_fallthru
      _
    // Predicated region
    $region38: #{tpu_custom_call.1} parent=1 // pred_check
      _
    $region39: #{tpu_custom_call.1} parent=1 // pred_check_branch
      %413 = sbr.rel (0) target = $region41
    $region40: #{tpu_custom_call.1} parent=1 // pred_region
      %414 = dma.done [#allocation9], 16
    $region41: #{tpu_custom_call.1} parent=1 // pred_fallthru
      _
    %415 = vsyncpa [#allocation5], 1
    %416 = vsyncpa [#allocation6], 1
    %417 = vsyncpa [#allocation9], 1

</llo_original>
